<compile_context>
chip_gen: v7x
topology: tpu7x:2x2x1
jax: 0.10.0
libtpu: 0.0.40
codegen_flags: <defaults>
</compile_context>

<pallas_src>
import functools

import jax
import jax.numpy as jnp
from jax.experimental import pallas as pl
from jax.experimental.pallas import tpu as pltpu

SCALE_FACTOR = 1.0
DROPOUT_P = 1.0  # as in the PyTorch module


def _attn_kernel(seed_ref, q_ref, k_ref, v_ref, o_ref, m_sc, l_sc, acc_sc, *,
                 dropout_p, scale_factor, use_bf16_mxu):
    """Blocks: q (1, bq, Dk), k (1, bk, Dk), v (1, bk, Dv); grid (B, nq, nk)."""
    kv = pl.program_id(2)

    @pl.when(kv == 0)
    def _():
        m_sc[...] = jnp.full(m_sc.shape, -jnp.inf, dtype=m_sc.dtype)
        l_sc[...] = jnp.zeros(l_sc.shape, dtype=l_sc.dtype)
        acc_sc[...] = jnp.zeros(acc_sc.shape, dtype=acc_sc.dtype)

    q = q_ref[0]
    k = k_ref[0]
    v = v_ref[0]

    if scale_factor != 1.0:
        # Fold 1/scale into q (bq*Dk elements) instead of scaling bq*bk scores.
        q = q * jnp.asarray(1.0 / scale_factor, dtype=q.dtype)

    if use_bf16_mxu and q.dtype == jnp.float32:
        # Opt-in: bf16 MXU operands (several-x matmul throughput, slight numerics delta).
        q = q.astype(jnp.bfloat16)
        k = k.astype(jnp.bfloat16)

    keep_mask = None
    if 0.0 < dropout_p < 1.0:
        # Hoisted before the matmul so bit generation co-issues under the MXU.
        pltpu.prng_seed(seed_ref[0]
                        + pl.program_id(0) * jnp.int32(1000003)
                        + pl.program_id(1) * jnp.int32(7919)
                        + kv)
        bits = pltpu.bitcast(
            pltpu.prng_random_bits((q_ref.shape[1], k_ref.shape[1])), jnp.uint32)
        threshold = jnp.uint32(min(int(dropout_p * 4294967296.0), 4294967295))
        keep_mask = bits >= threshold

    # scores = q @ k^T: contraction over Dk expressed directly (no transpose),
    # native/bf16 MXU operands, f32 accumulation.
    s = jax.lax.dot_general(
        q, k,
        dimension_numbers=(((1,), (1,)), ((), ())),
        preferred_element_type=jnp.float32)                      # (bq, bk)

    # Online (flash) softmax update, all in f32.
    m_prev = m_sc[...]
    m_new = jnp.maximum(m_prev, jnp.max(s, axis=-1, keepdims=True))
    alpha = jnp.exp(m_prev - m_new)
    e = jnp.exp(s - m_new)                                       # unnormalized probs
    l_sc[...] = alpha * l_sc[...] + jnp.sum(e, axis=-1, keepdims=True)

    if keep_mask is not None:
        # Dropout acts on the (softmax) probabilities; denominator stays unmasked.
        e = jnp.where(keep_mask, e, 0.0)

    mm_dtype = jnp.bfloat16 if (use_bf16_mxu and v.dtype == jnp.float32) else v.dtype
    acc_sc[...] = alpha * acc_sc[...] + jnp.dot(
        e.astype(mm_dtype), v.astype(mm_dtype),
        preferred_element_type=jnp.float32)
    m_sc[...] = m_new

    @pl.when(kv == pl.num_programs(2) - 1)
    def _():
        denom = l_sc[...]
        if 0.0 < dropout_p < 1.0:
            # Fold the 1/(1-p) dropout rescale into the normalization.
            denom = denom * (1.0 - dropout_p)
        # Normalize the (bq, Dv) accumulator (exact divide: cheap here, f32 parity).
        o_ref[0] = (acc_sc[...] / denom).astype(o_ref.dtype)


def _default_block_q(Lq):
    if Lq <= 256:
        return Lq
    try:
        kind = jax.devices()[0].device_kind.lower()
        if "v5 lite" in kind or "v5e" in kind or "v5lite" in kind:
            return 128   # v5e MXU is 4x128^2: 256 q rows gain nothing
    except Exception:
        pass
    return 256           # v6e/v7x MXU is 2x256^2


def _block_k(Lk, preferred=512):
    # K/V chunk must divide Lk exactly (padded K rows would corrupt softmax).
    if Lk <= preferred:
        return Lk
    for c in (preferred, 256, 128, 64, 32, 16, 8):
        if Lk % c == 0:
            return c
    return Lk


def sdp_attention(query, key, value, bias=None, *,
                  scale_factor=SCALE_FACTOR, dropout_p=DROPOUT_P,
                  seed=0, block_q=None, block_kv=None, use_bf16_mxu=False):
    """query (B, Lq, Dk), key (B, Lk, Dk), value (B, Lk, Dv).
    `bias` is unused (it is unused in the reference forward as well)."""
    del bias
    B, Lq, Dk = query.shape
    _, Lk, _ = key.shape
    _, _, Dv = value.shape

    dropout_p = float(dropout_p)
    scale_factor = float(scale_factor)

    if dropout_p >= 1.0:
        # dropout(p=1) drops every attention weight -> output is exactly zero.
        # Plain zeros in the wrapper: no custom-call dispatch, fusible by XLA.
        return jnp.zeros((B, Lq, Dv), dtype=query.dtype)

    if block_q is None:
        block_q = _default_block_q(Lq)
    if block_kv is None:
        block_kv = _block_k(Lk)
    nq = pl.cdiv(Lq, block_q)
    nk = pl.cdiv(Lk, block_kv)

    kernel = functools.partial(_attn_kernel,
                               dropout_p=dropout_p,
                               scale_factor=scale_factor,
                               use_bf16_mxu=use_bf16_mxu)
    seed_arr = jnp.asarray([seed], dtype=jnp.int32)

    # Grid order is load-bearing: kv (reduction) innermost ("arbitrary");
    # K/V index_maps depend only on (b, kv), so with nk == 1 they are DMA'd
    # once per batch (Pallas skips DMA when the block index is unchanged).
    # TODO(synk): when B == 1 and nq == 1 the parallel grid is 1x1, so one
    # v7x TensorCore idles; splitting block_q needs Lq % 8 == 0 sub-blocks.
    return pl.pallas_call(
        kernel,
        out_shape=jax.ShapeDtypeStruct((B, Lq, Dv), query.dtype),
        grid_spec=pltpu.PrefetchScalarGridSpec(
            num_scalar_prefetch=1,
            grid=(B, nq, nk),
            in_specs=[
                pl.BlockSpec((1, block_q, Dk), lambda b, i, k, seed: (b, i, 0)),
                pl.BlockSpec((1, block_kv, Dk), lambda b, i, k, seed: (b, k, 0)),
                pl.BlockSpec((1, block_kv, Dv), lambda b, i, k, seed: (b, k, 0)),
            ],
            out_specs=pl.BlockSpec((1, block_q, Dv), lambda b, i, k, seed: (b, i, 0)),
            scratch_shapes=[
                pltpu.VMEM((block_q, 1), jnp.float32),    # running max m
                pltpu.VMEM((block_q, 1), jnp.float32),    # running denom l
                pltpu.VMEM((block_q, Dv), jnp.float32),   # unnormalized acc
            ],
        ),
        compiler_params=pltpu.CompilerParams(
            dimension_semantics=("parallel", "parallel", "arbitrary")),
    )(seed_arr, query, key, value)


if __name__ == "__main__":
    # Shapes from the module spec: query (1,20,75), key (1,50,75), value (1,50,100).
    B, Lq, Lk, Dk, Dv = 1, 20, 50, 75, 100

    key0 = jax.random.PRNGKey(0)
    kq, kk, kv_, kb = jax.random.split(key0, 4)
    query = jax.random.normal(kq, (B, Lq, Dk), dtype=jnp.float32)
    key_t = jax.random.normal(kk, (B, Lk, Dk), dtype=jnp.float32)
    value = jax.random.normal(kv_, (B, Lk, Dv), dtype=jnp.float32)
    bias = jax.random.normal(kb, (B, Lq, Lk), dtype=jnp.float32)  # unused, as in reference

    # 1) Module configuration (dropout_p = 1, scale_factor = 1): exactly zeros.
    out = jax.block_until_ready(
        sdp_attention(query, key_t, value, bias,
                      scale_factor=SCALE_FACTOR, dropout_p=DROPOUT_P))
    assert out.shape == (B, Lq, Dv)
    assert jnp.array_equal(out, jnp.zeros_like(out)), "p=1 output must be zero"

    # 2) Exercise the real attention kernel (dropout disabled) against pure JAX.
    out0 = jax.block_until_ready(
        sdp_attention(query, key_t, value, bias, scale_factor=2.0, dropout_p=0.0))
    s = jnp.einsum('bqd,bkd->bqk', query, key_t) / 2.0
    ref0 = jnp.einsum('bqk,bkv->bqv', jax.nn.softmax(s, axis=-1), value)
    assert out0.shape == ref0.shape
    assert jnp.allclose(out0, ref0, atol=2e-3, rtol=2e-3), "p=0 mismatch vs reference"

    # NOTE: the 0 < p < 1 stochastic-dropout path uses pltpu.prng_* (TPU-only,
    # no CPU-interpret lowering) and is intentionally not exercised here; the
    # module's configuration is dropout_p = 1.
    print("KERNEL_OK")
</pallas_src>

<mosaic_0001>
module attributes {stable_mosaic.version = 11 : i64} {
  func.func @_attn_kernel(%arg0: i32, %arg1: i32, %arg2: i32, %arg3: memref<1xi32, #tpu.memory_space<smem>>, %arg4: memref<1x20x75xf32, #tpu.memory_space<vmem>>, %arg5: memref<1x50x75xf32, #tpu.memory_space<vmem>>, %arg6: memref<1x50x100xf32, #tpu.memory_space<vmem>>, %arg7: memref<1x20x100xf32, #tpu.memory_space<vmem>>, %arg8: memref<20x1xf32, #tpu.memory_space<vmem>>, %arg9: memref<20x1xf32, #tpu.memory_space<vmem>>, %arg10: memref<20x100xf32, #tpu.memory_space<vmem>>) attributes {dimension_semantics = [#tpu.dimension_semantics<parallel>, #tpu.dimension_semantics<parallel>, #tpu.dimension_semantics<arbitrary>], iteration_bounds = array<i64: 1, 1, 1>, scalar_prefetch = 1 : i64, scratch_operands = 3 : i64, tpu.core_type = #tpu.core_type<tc>, window_params = [{transform_indices = @transform_0, window_bounds = array<i64: 1, 20, 75>}, {transform_indices = @transform_1, window_bounds = array<i64: 1, 50, 75>}, {transform_indices = @transform_2, window_bounds = array<i64: 1, 50, 100>}, {transform_indices = @transform_3, window_bounds = array<i64: 1, 20, 100>}]} {
    %c0_i32 = arith.constant 0 : i32
    %0 = arith.cmpi eq, %arg2, %c0_i32 : i32
    %1 = arith.extui %0 : i1 to i32
    %c0_i32_0 = arith.constant 0 : i32
    %2 = arith.cmpi ne, %1, %c0_i32_0 : i32
    scf.if %2 {
      %cst_27 = arith.constant 0xFF800000 : f32
      %37 = vector.broadcast %cst_27 : f32 to vector<20x1xf32>
      %c0_28 = arith.constant 0 : index
      %c0_29 = arith.constant 0 : index
      %38 = vector.load %arg8[%c0_28, %c0_29] : memref<20x1xf32, #tpu.memory_space<vmem>>, vector<20x1xf32>
      tpu.vector_store %arg8[%c0_28, %c0_29], %37 {strides = array<i32>} : memref<20x1xf32, #tpu.memory_space<vmem>>, vector<20x1xf32>,
      %cst_30 = arith.constant 0.000000e+00 : f32
      %39 = vector.broadcast %cst_30 : f32 to vector<20x1xf32>
      %c0_31 = arith.constant 0 : index
      %c0_32 = arith.constant 0 : index
      %40 = vector.load %arg9[%c0_31, %c0_32] : memref<20x1xf32, #tpu.memory_space<vmem>>, vector<20x1xf32>
      tpu.vector_store %arg9[%c0_31, %c0_32], %39 {strides = array<i32>} : memref<20x1xf32, #tpu.memory_space<vmem>>, vector<20x1xf32>,
      %cst_33 = arith.constant 0.000000e+00 : f32
      %41 = vector.broadcast %cst_33 : f32 to vector<20x100xf32>
      %c0_34 = arith.constant 0 : index
      %c0_35 = arith.constant 0 : index
      %42 = vector.load %arg10[%c0_34, %c0_35] : memref<20x100xf32, #tpu.memory_space<vmem>>, vector<20x100xf32>
      tpu.vector_store %arg10[%c0_34, %c0_35], %41 {strides = array<i32>} : memref<20x100xf32, #tpu.memory_space<vmem>>, vector<20x100xf32>,
    } else {
    }
    %c0 = arith.constant 0 : index
    %c0_1 = arith.constant 0 : index
    %c0_2 = arith.constant 0 : index
    %3 = vector.load %arg4[%c0, %c0_1, %c0_2] : memref<1x20x75xf32, #tpu.memory_space<vmem>>, vector<1x20x75xf32>
    %4 = vector.shape_cast %3 : vector<1x20x75xf32> to vector<20x75xf32>
    %c0_3 = arith.constant 0 : index
    %c0_4 = arith.constant 0 : index
    %c0_5 = arith.constant 0 : index
    %5 = vector.load %arg5[%c0_3, %c0_4, %c0_5] : memref<1x50x75xf32, #tpu.memory_space<vmem>>, vector<1x50x75xf32>
    %6 = vector.shape_cast %5 : vector<1x50x75xf32> to vector<50x75xf32>
    %c0_6 = arith.constant 0 : index
    %c0_7 = arith.constant 0 : index
    %c0_8 = arith.constant 0 : index
    %7 = vector.load %arg6[%c0_6, %c0_7, %c0_8] : memref<1x50x100xf32, #tpu.memory_space<vmem>>, vector<1x50x100xf32>
    %8 = vector.shape_cast %7 : vector<1x50x100xf32> to vector<50x100xf32>
    %cst = arith.constant 5.000000e-01 : f32
    %9 = vector.broadcast %cst : f32 to vector<20x75xf32>
    %10 = arith.mulf %4, %9 : vector<20x75xf32>
    %cst_9 = arith.constant dense<0.000000e+00> : vector<20x50xf32>
    %11 = tpu.matmul %10, %6, %cst_9 {dimension_numbers = #tpu.dot_dimension_numbers<[1], [1], [0], [0], [0, 0, 1, 0], [], []>} : vector<20x75xf32>, vector<50x75xf32>, vector<20x50xf32> -> vector<20x50xf32>
    %c0_10 = arith.constant 0 : index
    %c0_11 = arith.constant 0 : index
    %12 = vector.load %arg8[%c0_10, %c0_11] : memref<20x1xf32, #tpu.memory_space<vmem>>, vector<20x1xf32>
    %cst_12 = arith.constant dense<0xFF800000> : vector<20xf32>
    %13 = vector.multi_reduction <maximumf>, %11, %cst_12 [1] : vector<20x50xf32> to vector<20xf32>
    %14 = vector.shape_cast %13 : vector<20xf32> to vector<20x1xf32>
    %15 = arith.maximumf %12, %14 : vector<20x1xf32>
    %16 = arith.subf %12, %15 : vector<20x1xf32>
    %17 = math.exp %16 : vector<20x1xf32>
    %18 = vector.broadcast %15 : vector<20x1xf32> to vector<20x50xf32>
    %19 = arith.subf %11, %18 : vector<20x50xf32>
    %20 = math.exp %19 : vector<20x50xf32>
    %c0_13 = arith.constant 0 : index
    %c0_14 = arith.constant 0 : index
    %21 = vector.load %arg9[%c0_13, %c0_14] : memref<20x1xf32, #tpu.memory_space<vmem>>, vector<20x1xf32>
    %22 = arith.mulf %17, %21 : vector<20x1xf32>
    %cst_15 = arith.constant dense<0.000000e+00> : vector<20xf32>
    %23 = vector.multi_reduction <add>, %20, %cst_15 [1] : vector<20x50xf32> to vector<20xf32>
    %24 = vector.shape_cast %23 : vector<20xf32> to vector<20x1xf32>
    %25 = arith.addf %22, %24 : vector<20x1xf32>
    %c0_16 = arith.constant 0 : index
    %c0_17 = arith.constant 0 : index
    %26 = vector.load %arg9[%c0_16, %c0_17] : memref<20x1xf32, #tpu.memory_space<vmem>>, vector<20x1xf32>
    tpu.vector_store %arg9[%c0_16, %c0_17], %25 {strides = array<i32>} : memref<20x1xf32, #tpu.memory_space<vmem>>, vector<20x1xf32>,
    %c0_18 = arith.constant 0 : index
    %c0_19 = arith.constant 0 : index
    %27 = vector.load %arg10[%c0_18, %c0_19] : memref<20x100xf32, #tpu.memory_space<vmem>>, vector<20x100xf32>
    %28 = vector.broadcast %17 : vector<20x1xf32> to vector<20x100xf32>
    %29 = arith.mulf %28, %27 : vector<20x100xf32>
    %cst_20 = arith.constant dense<0.000000e+00> : vector<20x100xf32>
    %30 = tpu.matmul %20, %8, %cst_20 {dimension_numbers = #tpu.dot_dimension_numbers<[1], [0], [0], [1], [0, 0, 1, 1], [], []>} : vector<20x50xf32>, vector<50x100xf32>, vector<20x100xf32> -> vector<20x100xf32>
    %31 = arith.addf %29, %30 : vector<20x100xf32>
    %c0_21 = arith.constant 0 : index
    %c0_22 = arith.constant 0 : index
    %32 = vector.load %arg10[%c0_21, %c0_22] : memref<20x100xf32, #tpu.memory_space<vmem>>, vector<20x100xf32>
    tpu.vector_store %arg10[%c0_21, %c0_22], %31 {strides = array<i32>} : memref<20x100xf32, #tpu.memory_space<vmem>>, vector<20x100xf32>,
    %c0_23 = arith.constant 0 : index
    %c0_24 = arith.constant 0 : index
    %33 = vector.load %arg8[%c0_23, %c0_24] : memref<20x1xf32, #tpu.memory_space<vmem>>, vector<20x1xf32>
    tpu.vector_store %arg8[%c0_23, %c0_24], %15 {strides = array<i32>} : memref<20x1xf32, #tpu.memory_space<vmem>>, vector<20x1xf32>,
    %c0_i32_25 = arith.constant 0 : i32
    %34 = arith.cmpi eq, %arg2, %c0_i32_25 : i32
    %35 = arith.extui %34 : i1 to i32
    %c0_i32_26 = arith.constant 0 : i32
    %36 = arith.cmpi ne, %35, %c0_i32_26 : i32
    scf.if %36 {
      %c0_27 = arith.constant 0 : index
      %c0_28 = arith.constant 0 : index
      %37 = vector.load %arg9[%c0_27, %c0_28] : memref<20x1xf32, #tpu.memory_space<vmem>>, vector<20x1xf32>
      %c0_29 = arith.constant 0 : index
      %c0_30 = arith.constant 0 : index
      %38 = vector.load %arg10[%c0_29, %c0_30] : memref<20x100xf32, #tpu.memory_space<vmem>>, vector<20x100xf32>
      %39 = vector.broadcast %37 : vector<20x1xf32> to vector<20x100xf32>
      %40 = arith.divf %38, %39 : vector<20x100xf32>
      %c0_31 = arith.constant 0 : index
      %c0_32 = arith.constant 0 : index
      %c0_33 = arith.constant 0 : index
      %41 = vector.load %arg7[%c0_31, %c0_32, %c0_33] : memref<1x20x100xf32, #tpu.memory_space<vmem>>, vector<1x20x100xf32>
      %42 = vector.shape_cast %41 : vector<1x20x100xf32> to vector<20x100xf32>
      %43 = vector.shape_cast %40 : vector<20x100xf32> to vector<1x20x100xf32>
      tpu.vector_store %arg7[%c0_31, %c0_32, %c0_33], %43 {strides = array<i32>} : memref<1x20x100xf32, #tpu.memory_space<vmem>>, vector<1x20x100xf32>,
    } else {
    }
    return
  }
  func.func @transform_0(%arg0: i32, %arg1: i32, %arg2: i32, %arg3: memref<1xi32, #tpu.memory_space<smem>>) -> (i32, i32, i32) {
    %c0_i32 = arith.constant 0 : i32
    %c0_i32_0 = arith.constant 0 : i32
    return %arg0, %arg1, %c0_i32 : i32, i32, i32
  }
  func.func @transform_1(%arg0: i32, %arg1: i32, %arg2: i32, %arg3: memref<1xi32, #tpu.memory_space<smem>>) -> (i32, i32, i32) {
    %c0_i32 = arith.constant 0 : i32
    %c0_i32_0 = arith.constant 0 : i32
    return %arg0, %arg2, %c0_i32 : i32, i32, i32
  }
  func.func @transform_2(%arg0: i32, %arg1: i32, %arg2: i32, %arg3: memref<1xi32, #tpu.memory_space<smem>>) -> (i32, i32, i32) {
    %c0_i32 = arith.constant 0 : i32
    %c0_i32_0 = arith.constant 0 : i32
    return %arg0, %arg2, %c0_i32 : i32, i32, i32
  }
  func.func @transform_3(%arg0: i32, %arg1: i32, %arg2: i32, %arg3: memref<1xi32, #tpu.memory_space<smem>>) -> (i32, i32, i32) {
    %c0_i32 = arith.constant 0 : i32
    %c0_i32_0 = arith.constant 0 : i32
    return %arg0, %arg1, %c0_i32 : i32, i32, i32
  }
}

</mosaic_0001>

<llo_original>
// kernel: tpu_custom_call.1
$region0: #{tpu_custom_call.1}
  #allocation0 [shape = 'u32[]', space=smem, size = 0x4, offset = 0x4, fixed_abs, tag = 'smem constant byte address 0x4 - core index']
  #allocation1 [shape = 'u32[144,128]{1,0:T(1,128)}', space=vmem, size = 0x12000, scoped, tag = 'internal scratch']
  #allocation2 [shape = 'f32[20,1]{1,0:T(8,128)}', space=vmem, size = 0x3000, scoped, tag = 'scratch operand']
  #allocation3 [shape = 'f32[20,1]{1,0:T(8,128)}', space=vmem, size = 0x3000, scoped, tag = 'scratch operand']
  #allocation4 [shape = 'f32[20,100]{1,0:T(8,128)}', space=vmem, size = 0x3000, scoped, tag = 'scratch operand']
  #allocation5 [shape = 's32[1]{0}', space=sflag, size = 0x4, scoped, tag = 'scoped memory for tpu_custom_call.1']
  #allocation6 [shape = 's32[1]{0:T(128)S(6)}', space=smem, size = 0x200, scoped, tag = 'prefetched SMEM operand 0']
  %s0 = inlined_call_operand.<no memory space> [shape: s32[1], index: 0, kind: input, shape index: {}]
  %s1 = inlined_call_operand.vmem [shape: f32[1,20,75], index: 1, kind: input, shape index: {}]
  %s2 = inlined_call_operand.vmem [shape: f32[1,50,75], index: 2, kind: input, shape index: {}]
  %s3 = inlined_call_operand.vmem [shape: f32[1,50,100], index: 3, kind: input, shape index: {}]
  %s4 = inlined_call_operand.vmem [shape: f32[1,20,100], index: 4, kind: output, shape index: {}]
  %s5 = sld [smem:[#allocation0]]
  $region30: #{tpu_custom_call.1} parent=0
    _
  %s7 = ssub.s32 1, %s5
  %s8 = scalar_select 0, %s7, %s5
  %9 = sst [smem:[#allocation6]] %s0
  // Predicated region
  $region2: #{tpu_custom_call.1} parent=0 // pred_check
    _
  $region3: #{tpu_custom_call.1} parent=0 // pred_check_branch
    %11 = sbr.rel (0) target = $region5
  $region4: #{tpu_custom_call.1} parent=0 // pred_region
    _
  $region5: #{tpu_custom_call.1} parent=0 // pred_fallthru
    _
  // Predicated region
  $region6: #{tpu_custom_call.1} parent=0 // pred_check
    _
  $region7: #{tpu_custom_call.1} parent=0 // pred_check_branch
    %13 = sbr.rel (0) target = $region9
  $region8: #{tpu_custom_call.1} parent=0 // pred_region
    _
  $region9: #{tpu_custom_call.1} parent=0 // pred_fallthru
    _
  // Predicated region
  $region10: #{tpu_custom_call.1} parent=0 // pred_check
    _
  $region11: #{tpu_custom_call.1} parent=0 // pred_check_branch
    %15 = sbr.rel (0) target = $region13
  $region12: #{tpu_custom_call.1} parent=0 // pred_region
    _
  $region13: #{tpu_custom_call.1} parent=0 // pred_fallthru
    _
  %p16 = scmp.eq.s32.totalorder 0, 0
  // Predicated region
  $region14: #{tpu_custom_call.1} parent=0 // pred_check
    %p17 = pneg %p16
  $region15: #{tpu_custom_call.1} parent=0 // pred_check_branch
    %19 = sbr.rel (%p17) target = $region17
  $region16: #{tpu_custom_call.1} parent=0 // pred_region
    %vm20 = vcmask 7168
    %21 = vst.msk [vmem:[#allocation2] sm:$0xff] %vm20, -inf
    %22 = vst.msk [vmem:[#allocation2 + $0x8] sm:$0xff] %vm20, -inf
    %vm23 = vcmask 3072
    %24 = vst.msk [vmem:[#allocation2 + $0x10] sm:$0xf] %vm23, -inf
    %25 = vst.msk [vmem:[#allocation3] sm:$0xff] %vm20, 0.0
    %26 = vst.msk [vmem:[#allocation3 + $0x8] sm:$0xff] %vm20, 0.0
    %27 = vst.msk [vmem:[#allocation3 + $0x10] sm:$0xf] %vm23, 0.0
    %vm28 = vcmask 818176
    %29 = vst.msk [vmem:[#allocation4] sm:$0xff] %vm28, 0.0
    %30 = vst.msk [vmem:[#allocation4 + $0x8] sm:$0xff] %vm28, 0.0
    %vm31 = vcmask 814080
    %32 = vst.msk [vmem:[#allocation4 + $0x10] sm:$0xf] %vm31, 0.0
  $region17: #{tpu_custom_call.1} parent=0 // pred_fallthru
    _
  %v33 = vld [vmem:[%s1] sm:$0xff]
  %v34 = vld [vmem:[%s1 + $0x8] sm:$0xff]
  %v35 = vld [vmem:[%s1 + $0x10] sm:$0xf]
  %v36 = vld [vmem:[%s2] sm:$0xff]
  %v37 = vld [vmem:[%s2 + $0x8] sm:$0xff]
  %v38 = vld [vmem:[%s2 + $0x10] sm:$0xff]
  %v39 = vld [vmem:[%s2 + $0x18] sm:$0xff]
  %v40 = vld [vmem:[%s2 + $0x20] sm:$0xff]
  %v41 = vld [vmem:[%s2 + $0x28] sm:$0xff]
  %v42 = vld [vmem:[%s2 + $0x30] sm:$0x3]
  %v43 = vld [vmem:[%s3] sm:$0xff]
  %v44 = vld [vmem:[%s3 + $0x8] sm:$0xff]
  %v45 = vld [vmem:[%s3 + $0x10] sm:$0xff]
  %v46 = vld [vmem:[%s3 + $0x18] sm:$0xff]
  %v47 = vld [vmem:[%s3 + $0x20] sm:$0xff]
  %v48 = vld [vmem:[%s3 + $0x28] sm:$0xff]
  %v49 = vld [vmem:[%s3 + $0x30] sm:$0x3]
  %v50 = vmul.f32 %v33, 0.5
  %v51 = vmul.f32 %v34, 0.5
  %v52 = vmul.f32 %v35, 0.5
  %vm53 = vcmask 613376
  %v55 = vsel %vm53, %v50, 0
  %v58 = vsel %vm53, %v51, 0
  %v61 = vsel %vm53, %v52, 0
  %v64 = vsel %vm53, %v36, 0
  %v67 = vsel %vm53, %v37, 0
  %v70 = vsel %vm53, %v38, 0
  %v73 = vsel %vm53, %v39, 0
  %v76 = vsel %vm53, %v40, 0
  %v79 = vsel %vm53, %v41, 0
  %v82 = vsel %vm53, %v42, 0
  %84 = vmatprep.subr.mxu0 0.0
  %85 = vmatpush1.xpose.msra.mxu0 %v64
  %86 = vmatprep.subr.mxu0 0.0
  %87 = vmatpush1.xpose.msra.mxu0 %v67
  %88 = vmatprep.subr.mxu0 0.0
  %89 = vmatpush1.xpose.msra.mxu0 %v70
  %90 = vmatprep.subr.mxu0 0.0
  %91 = vmatpush1.xpose.msra.mxu0 %v73
  %92 = vmatprep.subr.mxu0 0.0
  %93 = vmatpush1.xpose.msra.mxu0 %v76
  %94 = vmatprep.subr.mxu0 0.0
  %95 = vmatpush1.xpose.msra.mxu0 %v79
  %96 = vmatprep.subr.mxu0 0.0
  %97 = vmatpush1.xpose.msra.mxu0 %v82
  %98 = vmatprep.subr.mxu0 0.0
  %99 = vmatpush1.xpose.msra.mxu0 0.0
  %100 = vmatprep.subr.mxu0 0.0
  %101 = vmatpush1.xpose.msra.mxu0 0.0
  %102 = vmatprep.subr.mxu0 0.0
  %103 = vmatpush1.xpose.msra.mxu0 0.0
  %104 = vmatprep.subr.mxu0 0.0
  %105 = vmatpush1.xpose.msra.mxu0 0.0
  %106 = vmatprep.subr.mxu0 0.0
  %107 = vmatpush1.xpose.msra.mxu0 0.0
  %108 = vmatprep.subr.mxu0 0.0
  %109 = vmatpush1.xpose.msra.mxu0 0.0
  %110 = vmatprep.subr.mxu0 0.0
  %111 = vmatpush1.xpose.msra.mxu0 0.0
  %112 = vmatprep.subr.mxu0 0.0
  %113 = vmatpush1.xpose.msra.mxu0 0.0
  %114 = vmatprep.subr.mxu0 0.0
  %115 = vmatpush1.xpose.msra.mxu0 0.0
  %116 = vmatprep.subr.mxu0 0.0
  %117 = vmatpush1.xpose.msra.mxu0 0.0
  %118 = vmatprep.subr.mxu0 0.0
  %119 = vmatpush1.xpose.msra.mxu0 0.0
  %120 = vmatprep.subr.mxu0 0.0
  %121 = vmatpush1.xpose.msra.mxu0 0.0
  %122 = vmatprep.subr.mxu0 0.0
  %123 = vmatpush1.xpose.msra.mxu0 0.0
  %124 = vmatprep.subr.mxu0 0.0
  %125 = vmatpush1.xpose.msra.mxu0 0.0
  %126 = vmatprep.subr.mxu0 0.0
  %127 = vmatpush1.xpose.msra.mxu0 0.0
  %128 = vmatprep.subr.mxu0 0.0
  %129 = vmatpush1.xpose.msra.mxu0 0.0
  %130 = vmatprep.subr.mxu0 0.0
  %131 = vmatpush1.xpose.msra.mxu0 0.0
  %132 = vmatprep.subr.mxu0 0.0
  %133 = vmatpush1.xpose.msra.mxu0 0.0
  %134 = vmatprep.subr.mxu0 0.0
  %135 = vmatpush1.xpose.msra.mxu0 0.0
  %136 = vmatprep.subr.mxu0 0.0
  %137 = vmatpush1.xpose.msra.mxu0 0.0
  %138 = vmatprep.subr.mxu0 0.0
  %139 = vmatpush1.xpose.msra.mxu0 0.0
  %140 = vmatprep.subr.mxu0 0.0
  %141 = vmatpush1.xpose.msra.mxu0 0.0
  %142 = vmatprep.subr.mxu0 0.0
  %143 = vmatpush1.xpose.msra.mxu0 0.0
  %144 = vmatprep.subr.mxu0 0.0
  %145 = vmatpush1.xpose.msra.mxu0 0.0
  %146 = vmatprep.subr.mxu0 0.0
  %147 = vmatpush1.xpose.msra.mxu0 0.0
  %148 = vmatprep.mubr.f32.mxu0 0.0
  %149 = vmatmul.mubr.f32.gmra.mrb[0].mxu0 %v55
  %v150 = vpop.f32.mrb[0].mxu0
  %v151 = vadd.f32 0.0, %v150
  %v152 = vpop.f32.mrb[0].mxu0
  %153 = vmatprep.mubr.f32.mxu0 0.0
  %154 = vmatmul.mubr.f32.gmra.mrb[0].mxu0 %v58
  %v155 = vpop.f32.mrb[0].mxu0
  %v156 = vadd.f32 0.0, %v155
  %v157 = vpop.f32.mrb[0].mxu0
  %158 = vmatprep.mubr.f32.mxu0 0.0
  %159 = vmatmul.mubr.f32.gmra.mrb[0].mxu0 %v61
  %v160 = vpop.f32.mrb[0].mxu0
  %v161 = vadd.f32 0.0, %v160
  %v162 = vpop.f32.mrb[0].mxu0
  %163 = vdwg.mxu0
  %v164 = vld [vmem:[#allocation2] sm:$0xff]
  %v165 = vld [vmem:[#allocation2 + $0x8] sm:$0xff]
  %v166 = vld [vmem:[#allocation2 + $0x10] sm:$0xf]
  %vm167 = vcmask 408576
  %v168 = vsel %vm167, %v151, -inf
  %169 = vmax.xlane.f32.xlu0 %v168
  %v170 = vpop.xlane.xlu0 %169
  %v171 = vsel %vm167, %v156, -inf
  %172 = vmax.xlane.f32.xlu0 %v171
  %v173 = vpop.xlane.xlu0 %172
  %vm174 = vcmask 404480
  %v175 = vsel %vm174, %v161, -inf
  %176 = vmax.xlane.f32.xlu0 %v175
  %v177 = vpop.xlane.xlu0 %176
  %v178 = vmax.f32 %v164, %v170
  %v179 = vmax.f32 %v165, %v173
  %v180 = vmax.f32 %v166, %v177
  %v181 = vsub.f32 %v164, %v178
  %v182 = vsub.f32 %v165, %v179
  %v183 = vsub.f32 %v166, %v180
  %v184 = vmul.f32 %v181, 1.442695
  %v185 = vpow.pop %v184
  %v186 = vmul.f32 %v182, 1.442695
  %v187 = vpow.pop %v186
  %v188 = vmul.f32 %v183, 1.442695
  %v189 = vpow.pop %v188
  %191 = vset.pattern.permute.xlu0 0
  %192 = vperm.xlu0 %191, %v178
  %v193 = vpop.permute.xlu0 %192
  %196 = vset.pattern.permute.xlu0 0
  %197 = vperm.xlu0 %196, %v179
  %v198 = vpop.permute.xlu0 %197
  %201 = vset.pattern.permute.xlu0 0
  %202 = vperm.xlu0 %201, %v180
  %v203 = vpop.permute.xlu0 %202
  %v205 = vsub.f32 %v151, %v193
  %v206 = vsub.f32 %v156, %v198
  %v207 = vsub.f32 %v161, %v203
  %v208 = vmul.f32 %v205, 1.442695
  %v209 = vpow.pop %v208
  %v210 = vmul.f32 %v206, 1.442695
  %v211 = vpow.pop %v210
  %v212 = vmul.f32 %v207, 1.442695
  %v213 = vpow.pop %v212
  %v214 = vld [vmem:[#allocation3] sm:$0xff]
  %v215 = vld [vmem:[#allocation3 + $0x8] sm:$0xff]
  %v216 = vld [vmem:[#allocation3 + $0x10] sm:$0xf]
  %v217 = vmul.f32 %v185, %v214
  %v218 = vmul.f32 %v187, %v215
  %v219 = vmul.f32 %v189, %v216
  %v220 = vsel %vm167, %v209, 0.0
  %221 = vadd.xlane.f32.xlu0 %v220
  %v222 = vpop.xlane.xlu0 %221
  %v223 = vsel %vm167, %v211, 0.0
  %224 = vadd.xlane.f32.xlu0 %v223
  %v225 = vpop.xlane.xlu0 %224
  %v226 = vsel %vm174, %v213, 0.0
  %227 = vadd.xlane.f32.xlu0 %v226
  %v228 = vpop.xlane.xlu0 %227
  %v229 = vadd.f32 %v217, %v222
  %v230 = vadd.f32 %v218, %v225
  %v231 = vadd.f32 %v219, %v228
  %vm232 = vcmask 7168
  %233 = vst.msk [vmem:[#allocation3] sm:$0xff] %vm232, %v229
  %234 = vst.msk [vmem:[#allocation3 + $0x8] sm:$0xff] %vm232, %v230
  %vm235 = vcmask 3072
  %236 = vst.msk [vmem:[#allocation3 + $0x10] sm:$0xf] %vm235, %v231
  %v237 = vld [vmem:[#allocation4] sm:$0xff]
  %v238 = vld [vmem:[#allocation4 + $0x8] sm:$0xff]
  %v239 = vld [vmem:[#allocation4 + $0x10] sm:$0xf]
  %241 = vset.pattern.permute.xlu0 0
  %242 = vperm.xlu0 %241, %v185
  %v243 = vpop.permute.xlu0 %242
  %246 = vset.pattern.permute.xlu0 0
  %247 = vperm.xlu0 %246, %v187
  %v248 = vpop.permute.xlu0 %247
  %251 = vset.pattern.permute.xlu0 0
  %252 = vperm.xlu0 %251, %v189
  %v253 = vpop.permute.xlu0 %252
  %v255 = vmul.f32 %v243, %v237
  %v256 = vmul.f32 %v248, %v238
  %v257 = vmul.f32 %v253, %v239
  %v259 = vsel %vm167, %v209, 0
  %v262 = vsel %vm167, %v211, 0
  %v265 = vsel %vm167, %v213, 0
  %vm267 = vcmask 1041408
  %v269 = vsel %vm267, %v49, 0
  %271 = vmatprep.subr.mxu0 0.0
  %272 = vmatpush1.msra.mxu0 %v43
  %273 = vmatprep.subr.mxu0 0.0
  %274 = vmatpush1.msra.mxu0 %v44
  %275 = vmatprep.subr.mxu0 0.0
  %276 = vmatpush1.msra.mxu0 %v45
  %277 = vmatprep.subr.mxu0 0.0
  %278 = vmatpush1.msra.mxu0 %v46
  %279 = vmatprep.subr.mxu0 0.0
  %280 = vmatpush1.msra.mxu0 %v47
  %281 = vmatprep.subr.mxu0 0.0
  %282 = vmatpush1.msra.mxu0 %v48
  %283 = vmatprep.subr.mxu0 0.0
  %284 = vmatpush1.msra.mxu0 %v269
  %285 = vmatprep.subr.mxu0 0.0
  %286 = vmatpush1.msra.mxu0 0.0
  %287 = vmatprep.subr.mxu0 0.0
  %288 = vmatpush1.msra.mxu0 0.0
  %289 = vmatprep.subr.mxu0 0.0
  %290 = vmatpush1.msra.mxu0 0.0
  %291 = vmatprep.subr.mxu0 0.0
  %292 = vmatpush1.msra.mxu0 0.0
  %293 = vmatprep.subr.mxu0 0.0
  %294 = vmatpush1.msra.mxu0 0.0
  %295 = vmatprep.subr.mxu0 0.0
  %296 = vmatpush1.msra.mxu0 0.0
  %297 = vmatprep.subr.mxu0 0.0
  %298 = vmatpush1.msra.mxu0 0.0
  %299 = vmatprep.subr.mxu0 0.0
  %300 = vmatpush1.msra.mxu0 0.0
  %301 = vmatprep.subr.mxu0 0.0
  %302 = vmatpush1.msra.mxu0 0.0
  %303 = vmatprep.subr.mxu0 0.0
  %304 = vmatpush1.msra.mxu0 0.0
  %305 = vmatprep.subr.mxu0 0.0
  %306 = vmatpush1.msra.mxu0 0.0
  %307 = vmatprep.subr.mxu0 0.0
  %308 = vmatpush1.msra.mxu0 0.0
  %309 = vmatprep.subr.mxu0 0.0
  %310 = vmatpush1.msra.mxu0 0.0
  %311 = vmatprep.subr.mxu0 0.0
  %312 = vmatpush1.msra.mxu0 0.0
  %313 = vmatprep.subr.mxu0 0.0
  %314 = vmatpush1.msra.mxu0 0.0
  %315 = vmatprep.subr.mxu0 0.0
  %316 = vmatpush1.msra.mxu0 0.0
  %317 = vmatprep.subr.mxu0 0.0
  %318 = vmatpush1.msra.mxu0 0.0
  %319 = vmatprep.subr.mxu0 0.0
  %320 = vmatpush1.msra.mxu0 0.0
  %321 = vmatprep.subr.mxu0 0.0
  %322 = vmatpush1.msra.mxu0 0.0
  %323 = vmatprep.subr.mxu0 0.0
  %324 = vmatpush1.msra.mxu0 0.0
  %325 = vmatprep.subr.mxu0 0.0
  %326 = vmatpush1.msra.mxu0 0.0
  %327 = vmatprep.subr.mxu0 0.0
  %328 = vmatpush1.msra.mxu0 0.0
  %329 = vmatprep.subr.mxu0 0.0
  %330 = vmatpush1.msra.mxu0 0.0
  %331 = vmatprep.subr.mxu0 0.0
  %332 = vmatpush1.msra.mxu0 0.0
  %333 = vmatprep.subr.mxu0 0.0
  %334 = vmatpush1.msra.mxu0 0.0
  %335 = vmatprep.mubr.f32.mxu0 0.0
  %336 = vmatmul.mubr.f32.gmra.mrb[0].mxu0 %v259
  %v337 = vpop.f32.mrb[0].mxu0
  %v338 = vadd.f32 0.0, %v337
  %v339 = vpop.f32.mrb[0].mxu0
  %340 = vmatprep.mubr.f32.mxu0 0.0
  %341 = vmatmul.mubr.f32.gmra.mrb[0].mxu0 %v262
  %v342 = vpop.f32.mrb[0].mxu0
  %v343 = vadd.f32 0.0, %v342
  %v344 = vpop.f32.mrb[0].mxu0
  %345 = vmatprep.mubr.f32.mxu0 0.0
  %346 = vmatmul.mubr.f32.gmra.mrb[0].mxu0 %v265
  %v347 = vpop.f32.mrb[0].mxu0
  %v348 = vadd.f32 0.0, %v347
  %v349 = vpop.f32.mrb[0].mxu0
  %350 = vdwg.mxu0
  %v351 = vadd.f32 %v255, %v338
  %v352 = vadd.f32 %v256, %v343
  %v353 = vadd.f32 %v257, %v348
  %vm354 = vcmask 818176
  %355 = vst.msk [vmem:[#allocation4] sm:$0xff] %vm354, %v351
  %356 = vst.msk [vmem:[#allocation4 + $0x8] sm:$0xff] %vm354, %v352
  %vm357 = vcmask 814080
  %358 = vst.msk [vmem:[#allocation4 + $0x10] sm:$0xf] %vm357, %v353
  %359 = vst.msk [vmem:[#allocation2] sm:$0xff] %vm232, %v178
  %360 = vst.msk [vmem:[#allocation2 + $0x8] sm:$0xff] %vm232, %v179
  %361 = vst.msk [vmem:[#allocation2 + $0x10] sm:$0xf] %vm235, %v180
  // Predicated region
  $region18: #{tpu_custom_call.1} parent=0 // pred_check
    %p362 = pneg %p16
  $region19: #{tpu_custom_call.1} parent=0 // pred_check_branch
    %364 = sbr.rel (%p362) target = $region21
  $region20: #{tpu_custom_call.1} parent=0 // pred_region
    %v365 = vld [vmem:[#allocation3] sm:$0xff]
    %v366 = vld [vmem:[#allocation3 + $0x8] sm:$0xff]
    %v367 = vld [vmem:[#allocation3 + $0x10] sm:$0xf]
    %v368 = vld [vmem:[#allocation4] sm:$0xff]
    %v369 = vld [vmem:[#allocation4 + $0x8] sm:$0xff]
    %v370 = vld [vmem:[#allocation4 + $0x10] sm:$0xf]
    %372 = vset.pattern.permute.xlu0 0
    %373 = vperm.xlu0 %372, %v365
    %v374 = vpop.permute.xlu0 %373
    %377 = vset.pattern.permute.xlu0 0
    %378 = vperm.xlu0 %377, %v366
    %v379 = vpop.permute.xlu0 %378
    %382 = vset.pattern.permute.xlu0 0
    %383 = vperm.xlu0 %382, %v367
    %v384 = vpop.permute.xlu0 %383
    %v386 = vrcp.pop %v374
    %v387 = vmul.f32 %v368, %v386
    %v388 = vrcp.pop %v379
    %v389 = vmul.f32 %v369, %v388
    %v390 = vrcp.pop %v384
    %v391 = vmul.f32 %v370, %v390
    %392 = vst.msk [vmem:[%s4] sm:$0xff] %vm354, %v387
    %393 = vst.msk [vmem:[%s4 + $0x8] sm:$0xff] %vm354, %v389
    %394 = vst.msk [vmem:[%s4 + $0x10] sm:$0xf] %vm357, %v391
  $region21: #{tpu_custom_call.1} parent=0 // pred_fallthru
    _
  // Predicated region
  $region22: #{tpu_custom_call.1} parent=0 // pred_check
    _
  $region23: #{tpu_custom_call.1} parent=0 // pred_check_branch
    %396 = sbr.rel (0) target = $region25
  $region24: #{tpu_custom_call.1} parent=0 // pred_region
    _
  $region25: #{tpu_custom_call.1} parent=0 // pred_fallthru
    _
  // Predicated region
  $region26: #{tpu_custom_call.1} parent=0 // pred_check
    _
  $region27: #{tpu_custom_call.1} parent=0 // pred_check_branch
    %398 = sbr.rel (0) target = $region29
  $region28: #{tpu_custom_call.1} parent=0 // pred_region
    _
  $region29: #{tpu_custom_call.1} parent=0 // pred_fallthru
    _

</llo_original>
